<compile_context>
chip_gen: v7x
topology: tpu7x:2x2x1
jax: 0.10.0
libtpu: 0.0.40
codegen_flags: <defaults>
</compile_context>

<pallas_src>
import functools

import jax
import jax.numpy as jnp
from jax.experimental import pallas as pl
from jax.experimental.pallas import tpu as pltpu


def _round_up(x, m):
    return ((x + m - 1) // m) * m


def pack_params(Wh, bh, wa, ba, wb, bb):
    """Pack all parameters into one sublane-aligned f32 slab (do ONCE at init).

    Layout (rows, cols = max(K, 2)):
      rows [0, dim)                         : Wh            (dim, K)
      row  dim_pad                          : bh            (1, K)
      row  dim_pad + 1, cols 0..1           : [ba, bb]
      rows [dim_pad + 8, dim_pad + 8 + K)   : Wab = [wa|wb] (K, 2)
    """
    dim, K = Wh.shape
    dim_pad = _round_up(dim, 8)
    cols = max(K, 2)
    rows = dim_pad + 8 + _round_up(K, 8)
    slab = jnp.zeros((rows, cols), jnp.float32)
    slab = slab.at[0:dim, 0:K].set(Wh.astype(jnp.float32))
    slab = slab.at[dim_pad, 0:K].set(bh.reshape(-1).astype(jnp.float32))
    slab = slab.at[dim_pad + 1, 0].set(jnp.asarray(ba, jnp.float32).reshape(()))
    slab = slab.at[dim_pad + 1, 1].set(jnp.asarray(bb, jnp.float32).reshape(()))
    slab = slab.at[dim_pad + 8: dim_pad + 8 + K, 0].set(
        wa.reshape(-1).astype(jnp.float32))
    slab = slab.at[dim_pad + 8: dim_pad + 8 + K, 1].set(
        wb.reshape(-1).astype(jnp.float32))
    return slab


def pack_inputs(E, T):
    """Pack event indicator and time into one (N, 2) operand (once per dataset)."""
    return jnp.concatenate([E.reshape(-1, 1), T.reshape(-1, 1)],
                           axis=1).astype(jnp.float32)


def _weibull_forward_kernel(dim, dim_pad, K, et_ref, z_ref, w_ref,
                            hz_ref, sv_ref):
    # Static slices into the packed parameter slab (no data movement).
    wh = w_ref[0:dim, 0:K]                              # (dim, K)
    bh = w_ref[dim_pad:dim_pad + 1, 0:K]                # (1, K)
    bab = w_ref[dim_pad + 1:dim_pad + 2, 0:2]           # (1, 2) = [ba, bb]
    wab = w_ref[dim_pad + 8:dim_pad + 8 + K, 0:2]       # (K, 2) = [wa | wb]

    # Hidden layer on the MXU: tanh(Z @ Wh + bh) -> (N, K)
    hidden = jnp.tanh(
        jnp.dot(z_ref[...], wh, preferred_element_type=jnp.float32) + bh)

    # Fused heads: one (K, 2) projection; col 0 -> alpha, col 1 -> beta.
    ab = jnp.dot(hidden, wab, preferred_element_type=jnp.float32) + bab
    log_scale = -ab[:, 0:1]                             # LogScale_H(hidden)
    log_shape = -ab[:, 1:2]                             # LogShape_H(hidden)
    scale = jnp.exp(log_scale)                          # Scale_H(hidden)

    e = et_ref[:, 0:1]                                  # event indicator
    log_t = jnp.log(et_ref[:, 1:2])                     # log(T); T > 0 assumed
                                                        # (NaN propagates exactly
                                                        # like the PyTorch module)

    log_hazard = log_shape + log_scale + (scale - 1.0) * log_t
    log_cum_hazard = log_shape + scale * log_t

    # Two direct sub-slice stores (no iota / compare / select).
    hz_ref[...] = e * log_hazard
    sv_ref[...] = -jnp.exp(log_cum_hazard)


def weibull_forward(ET, Z, w_slab, *, dim, K, block_rows=None):
    """Hot path.  ET: (N,2) packed [E|T], Z: (N,dim), w_slab: pack_params output.

    Returns (E * log_hazard, log_survival), each (N, 1).
    block_rows: optional batch tiling for large N (use the biggest tile that
    fits scoped VMEM; enables megacore sharding on v7x).
    """
    N = Z.shape[0]
    dim_pad = _round_up(dim, 8)
    kernel = functools.partial(_weibull_forward_kernel, dim, dim_pad, K)

    out_shape = (jax.ShapeDtypeStruct((N, 1), jnp.float32),
                 jax.ShapeDtypeStruct((N, 1), jnp.float32))
    cost = pl.CostEstimate(
        flops=2 * N * dim * K + 2 * N * K * 2 + 12 * N,
        transcendentals=N * K + 3 * N,               # tanh + 2*exp + log per row
        bytes_accessed=4 * (N * 2 + N * dim + w_slab.size + 2 * N),
    )

    if block_rows is None or block_rows >= N or N % block_rows != 0:
        # Tiny-N path: no grid (a 1-step pipeline only pays prologue/epilogue
        # cost and double-buffers every operand).  Whole arrays live in VMEM.
        vmem = pl.BlockSpec(memory_space=pltpu.MemorySpace.VMEM)
        return pl.pallas_call(
            kernel,
            out_shape=out_shape,
            in_specs=[vmem, vmem, vmem],
            out_specs=(vmem, vmem),
            cost_estimate=cost,
        )(ET, Z, w_slab)

    # Large-N path: tile the batch; weights are re-presented (same block) each
    # step.  "parallel" lets v7x shard the grid across both TensorCores.
    grid = (N // block_rows,)
    slab_shape = w_slab.shape
    in_specs = [
        pl.BlockSpec((block_rows, 2), lambda i: (i, 0)),        # ET
        pl.BlockSpec((block_rows, Z.shape[1]), lambda i: (i, 0)),  # Z
        pl.BlockSpec(slab_shape, lambda i: (0, 0)),             # params (full)
    ]
    out_specs = (pl.BlockSpec((block_rows, 1), lambda i: (i, 0)),
                 pl.BlockSpec((block_rows, 1), lambda i: (i, 0)))
    return pl.pallas_call(
        kernel,
        out_shape=out_shape,
        grid=grid,
        in_specs=in_specs,
        out_specs=out_specs,
        compiler_params=pltpu.CompilerParams(
            dimension_semantics=("parallel",)),
        cost_estimate=cost,
    )(ET, Z, w_slab)


def _reference_forward(E, T, Z, Wh, bh, wa, ba, wb, bb):
    """Plain-JAX reference mirroring the PyTorch module (for sanity check)."""
    hidden = jnp.tanh(Z @ Wh + bh)
    log_scale = -(hidden @ wa + ba)
    log_shape = -(hidden @ wb + bb)
    scale = jnp.exp(log_scale)
    log_t = jnp.log(T)
    log_hazard = log_shape + log_scale + (scale - 1.0) * log_t
    log_survival = -jnp.exp(log_shape + scale * log_t)
    return E * log_hazard, log_survival


if __name__ == "__main__":
    dim, K = 32, 16

    key = jax.random.PRNGKey(0)
    k_z, k_t, k_e, k_wh, k_bh, k_wa, k_ba, k_wb, k_bb = jax.random.split(key, 9)

    # Deterministic parameter init (PyTorch Linear-style uniform bounds).
    def uinit(k, shape, fan_in):
        bound = 1.0 / jnp.sqrt(jnp.float32(fan_in))
        return jax.random.uniform(k, shape, dtype=jnp.float32,
                                  minval=-bound, maxval=bound)

    Wh = uinit(k_wh, (dim, K), dim)   # H.weight (transposed to (dim, K))
    bh = uinit(k_bh, (1, K), dim)     # H.bias
    wa = uinit(k_wa, (K, 1), K)       # alpha.weight (transposed)
    ba = uinit(k_ba, (1, 1), K)       # alpha.bias
    wb = uinit(k_wb, (K, 1), K)       # beta.weight (transposed)
    bb = uinit(k_bb, (1, 1), K)       # beta.bias

    # Pack parameters ONCE (outside the per-call hot path).
    w_slab = pack_params(Wh, bh, wa, ba, wb, bb)

    # ---- tiny-N path (the module's actual regime) --------------------------
    N = 8
    Z = jax.random.normal(k_z, (N, dim), dtype=jnp.float32)
    T = jax.random.uniform(k_t, (N, 1), dtype=jnp.float32, minval=0.5, maxval=5.0)
    E = jax.random.bernoulli(k_e, 0.6, (N, 1)).astype(jnp.float32)
    ET = pack_inputs(E, T)            # packed once per dataset, not per call

    e_log_hazard, log_survival = weibull_forward(ET, Z, w_slab, dim=dim, K=K)
    jax.block_until_ready((e_log_hazard, log_survival))

    ref_hz, ref_sv = _reference_forward(E, T, Z, Wh, bh, wa, ba, wb, bb)
    assert e_log_hazard.shape == (N, 1) and log_survival.shape == (N, 1)
    assert jnp.allclose(e_log_hazard, ref_hz, atol=1e-4, rtol=1e-4)
    assert jnp.allclose(log_survival, ref_sv, atol=1e-4, rtol=1e-4)

    # ---- large-N tiled path (batch grid, megacore-ready on v7x) ------------
    N2 = 1024
    k2 = jax.random.split(key, 3)
    Z2 = jax.random.normal(k2[0], (N2, dim), dtype=jnp.float32)
    T2 = jax.random.uniform(k2[1], (N2, 1), dtype=jnp.float32,
                            minval=0.5, maxval=5.0)
    E2 = jax.random.bernoulli(k2[2], 0.6, (N2, 1)).astype(jnp.float32)
    ET2 = pack_inputs(E2, T2)

    hz2, sv2 = weibull_forward(ET2, Z2, w_slab, dim=dim, K=K, block_rows=256)
    jax.block_until_ready((hz2, sv2))

    ref_hz2, ref_sv2 = _reference_forward(E2, T2, Z2, Wh, bh, wa, ba, wb, bb)
    assert jnp.allclose(hz2, ref_hz2, atol=1e-4, rtol=1e-4)
    assert jnp.allclose(sv2, ref_sv2, atol=1e-4, rtol=1e-4)

    print("KERNEL_OK")
</pallas_src>

<mosaic_0001>
module attributes {stable_mosaic.version = 11 : i64} {
  func.func @_weibull_forward_kernel(%arg0: memref<8x2xf32, #tpu.memory_space<vmem>>, %arg1: memref<8x32xf32, #tpu.memory_space<vmem>>, %arg2: memref<56x16xf32, #tpu.memory_space<vmem>>, %arg3: memref<8x1xf32, #tpu.memory_space<vmem>>, %arg4: memref<8x1xf32, #tpu.memory_space<vmem>>) attributes {dimension_semantics = [], scalar_prefetch = 0 : i64, scratch_operands = 0 : i64, tpu.core_type = #tpu.core_type<tc>} {
    %c0 = arith.constant 0 : index
    %c0_0 = arith.constant 0 : index
    %0 = vector.load %arg2[%c0, %c0_0] : memref<56x16xf32, #tpu.memory_space<vmem>>, vector<32x16xf32>
    %c32 = arith.constant 32 : index
    %c0_1 = arith.constant 0 : index
    %1 = vector.load %arg2[%c32, %c0_1] : memref<56x16xf32, #tpu.memory_space<vmem>>, vector<1x16xf32>
    %c33 = arith.constant 33 : index
    %c0_2 = arith.constant 0 : index
    %2 = vector.load %arg2[%c33, %c0_2] : memref<56x16xf32, #tpu.memory_space<vmem>>, vector<1x2xf32>
    %c40 = arith.constant 40 : index
    %c0_3 = arith.constant 0 : index
    %3 = vector.load %arg2[%c40, %c0_3] : memref<56x16xf32, #tpu.memory_space<vmem>>, vector<16x2xf32>
    %c0_4 = arith.constant 0 : index
    %c0_5 = arith.constant 0 : index
    %4 = vector.load %arg1[%c0_4, %c0_5] : memref<8x32xf32, #tpu.memory_space<vmem>>, vector<8x32xf32>
    %cst = arith.constant dense<0.000000e+00> : vector<8x16xf32>
    %5 = tpu.matmul %4, %0, %cst {dimension_numbers = #tpu.dot_dimension_numbers<[1], [0], [0], [1], [0, 0, 1, 1], [], []>} : vector<8x32xf32>, vector<32x16xf32>, vector<8x16xf32> -> vector<8x16xf32>
    %6 = vector.broadcast %1 : vector<1x16xf32> to vector<8x16xf32>
    %7 = arith.addf %5, %6 : vector<8x16xf32>
    %8 = math.tanh %7 : vector<8x16xf32>
    %cst_6 = arith.constant dense<0.000000e+00> : vector<8x2xf32>
    %9 = tpu.matmul %8, %3, %cst_6 {dimension_numbers = #tpu.dot_dimension_numbers<[1], [0], [0], [1], [0, 0, 1, 1], [], []>} : vector<8x16xf32>, vector<16x2xf32>, vector<8x2xf32> -> vector<8x2xf32>
    %10 = vector.broadcast %2 : vector<1x2xf32> to vector<8x2xf32>
    %11 = arith.addf %9, %10 : vector<8x2xf32>
    %12 = vector.extract_strided_slice %11 {offsets = [0, 0], sizes = [8, 1], strides = [1, 1]} : vector<8x2xf32> to vector<8x1xf32>
    %cst_7 = arith.constant 0.000000e+00 : f32
    %13 = vector.broadcast %cst_7 : f32 to vector<8x1xf32>
    %14 = arith.subf %13, %12 : vector<8x1xf32>
    %15 = vector.extract_strided_slice %11 {offsets = [0, 1], sizes = [8, 1], strides = [1, 1]} : vector<8x2xf32> to vector<8x1xf32>
    %cst_8 = arith.constant 0.000000e+00 : f32
    %16 = vector.broadcast %cst_8 : f32 to vector<8x1xf32>
    %17 = arith.subf %16, %15 : vector<8x1xf32>
    %18 = math.exp %14 : vector<8x1xf32>
    %c0_9 = arith.constant 0 : index
    %c0_10 = arith.constant 0 : index
    %19 = vector.load %arg0[%c0_9, %c0_10] : memref<8x2xf32, #tpu.memory_space<vmem>>, vector<8x1xf32>
    %c0_11 = arith.constant 0 : index
    %c1 = arith.constant 1 : index
    %20 = vector.load %arg0[%c0_11, %c1] : memref<8x2xf32, #tpu.memory_space<vmem>>, vector<8x1xf32>
    %21 = math.log %20 : vector<8x1xf32>
    %22 = arith.addf %17, %14 : vector<8x1xf32>
    %cst_12 = arith.constant 1.000000e+00 : f32
    %23 = vector.broadcast %cst_12 : f32 to vector<8x1xf32>
    %24 = arith.subf %18, %23 : vector<8x1xf32>
    %25 = arith.mulf %24, %21 : vector<8x1xf32>
    %26 = arith.addf %22, %25 : vector<8x1xf32>
    %27 = arith.mulf %18, %21 : vector<8x1xf32>
    %28 = arith.addf %17, %27 : vector<8x1xf32>
    %29 = arith.mulf %19, %26 : vector<8x1xf32>
    %c0_13 = arith.constant 0 : index
    %c0_14 = arith.constant 0 : index
    %30 = vector.load %arg3[%c0_13, %c0_14] : memref<8x1xf32, #tpu.memory_space<vmem>>, vector<8x1xf32>
    tpu.vector_store %arg3[%c0_13, %c0_14], %29 {strides = array<i32>} : memref<8x1xf32, #tpu.memory_space<vmem>>, vector<8x1xf32>,
    %31 = math.exp %28 : vector<8x1xf32>
    %cst_15 = arith.constant 0.000000e+00 : f32
    %32 = vector.broadcast %cst_15 : f32 to vector<8x1xf32>
    %33 = arith.subf %32, %31 : vector<8x1xf32>
    %c0_16 = arith.constant 0 : index
    %c0_17 = arith.constant 0 : index
    %34 = vector.load %arg4[%c0_16, %c0_17] : memref<8x1xf32, #tpu.memory_space<vmem>>, vector<8x1xf32>
    tpu.vector_store %arg4[%c0_16, %c0_17], %33 {strides = array<i32>} : memref<8x1xf32, #tpu.memory_space<vmem>>, vector<8x1xf32>,
    return
  }
}

</mosaic_0001>

<llo_original>
// kernel: tpu_custom_call.1
$region0: #{tpu_custom_call.1}
  #allocation0 [shape = 'u32[]', space=smem, size = 0x4, offset = 0x4, fixed_abs, tag = 'smem constant byte address 0x4 - core index']
  #allocation1 [shape = 'u32[144,128]{1,0:T(1,128)}', space=vmem, size = 0x12000, scoped, tag = 'internal scratch']
  %s0 = inlined_call_operand.vmem [shape: f32[8,2], index: 0, kind: input, shape index: {}]
  %s1 = inlined_call_operand.vmem [shape: f32[8,32], index: 1, kind: input, shape index: {}]
  %s2 = inlined_call_operand.vmem [shape: f32[56,16], index: 2, kind: input, shape index: {}]
  %s3 = inlined_call_operand.vmem [shape: f32[8,1], index: 3, kind: output, shape index: {0}]
  %s4 = inlined_call_operand.vmem [shape: f32[8,1], index: 4, kind: output, shape index: {1}]
  %5 = xla_tuple %s3, %s4
  %s6 = sld [smem:[#allocation0]]
  $region30: #{tpu_custom_call.1} parent=0
    _
  %s8 = ssub.s32 1, %s6
  %s9 = scalar_select 0, %s8, %s6
  // Predicated region
  $region2: #{tpu_custom_call.1} parent=0 // pred_check
    _
  $region3: #{tpu_custom_call.1} parent=0 // pred_check_branch
    %11 = sbr.rel (0) target = $region5
  $region4: #{tpu_custom_call.1} parent=0 // pred_region
    _
  $region5: #{tpu_custom_call.1} parent=0 // pred_fallthru
    _
  // Predicated region
  $region6: #{tpu_custom_call.1} parent=0 // pred_check
    _
  $region7: #{tpu_custom_call.1} parent=0 // pred_check_branch
    %13 = sbr.rel (0) target = $region9
  $region8: #{tpu_custom_call.1} parent=0 // pred_region
    _
  $region9: #{tpu_custom_call.1} parent=0 // pred_fallthru
    _
  // Predicated region
  $region10: #{tpu_custom_call.1} parent=0 // pred_check
    _
  $region11: #{tpu_custom_call.1} parent=0 // pred_check_branch
    %15 = sbr.rel (0) target = $region13
  $region12: #{tpu_custom_call.1} parent=0 // pred_region
    _
  $region13: #{tpu_custom_call.1} parent=0 // pred_fallthru
    _
  %v16 = vld [vmem:[%s2] sm:$0xff]
  %v17 = vld [vmem:[%s2 + $0x8] sm:$0xff]
  %v18 = vld [vmem:[%s2 + $0x10] sm:$0xff]
  %v19 = vld [vmem:[%s2 + $0x18] sm:$0xff]
  %v20 = vld [vmem:[%s2 + $0x20] sm:$0x1]
  %v21 = vld [vmem:[%s2 + $0x21] sm:$0x1]
  %v22 = vld [vmem:[%s2 + $0x28] sm:$0xff]
  %v23 = vld [vmem:[%s2 + $0x30] sm:$0xff]
  %v24 = vld [vmem:[%s1] sm:$0xff]
  %v25 = vlaneseq
  %v26 = vshrl.u32 %v25, 7
  %v27 = vsub.s32 0, %v26
  %v28 = vrot.slane %v20, %v27
  %vm29 = vcmask 261120
  %v31 = vsel %vm29, %v24, 0
  %33 = vmatprep.subr.mxu0 0.0
  %34 = vmatpush1.msra.mxu0 %v16
  %35 = vmatprep.subr.mxu0 0.0
  %36 = vmatpush1.msra.mxu0 %v17
  %37 = vmatprep.subr.mxu0 0.0
  %38 = vmatpush1.msra.mxu0 %v18
  %39 = vmatprep.subr.mxu0 0.0
  %40 = vmatpush1.msra.mxu0 %v19
  %41 = vmatprep.subr.mxu0 0.0
  %42 = vmatpush1.msra.mxu0 0.0
  %43 = vmatprep.subr.mxu0 0.0
  %44 = vmatpush1.msra.mxu0 0.0
  %45 = vmatprep.subr.mxu0 0.0
  %46 = vmatpush1.msra.mxu0 0.0
  %47 = vmatprep.subr.mxu0 0.0
  %48 = vmatpush1.msra.mxu0 0.0
  %49 = vmatprep.subr.mxu0 0.0
  %50 = vmatpush1.msra.mxu0 0.0
  %51 = vmatprep.subr.mxu0 0.0
  %52 = vmatpush1.msra.mxu0 0.0
  %53 = vmatprep.subr.mxu0 0.0
  %54 = vmatpush1.msra.mxu0 0.0
  %55 = vmatprep.subr.mxu0 0.0
  %56 = vmatpush1.msra.mxu0 0.0
  %57 = vmatprep.subr.mxu0 0.0
  %58 = vmatpush1.msra.mxu0 0.0
  %59 = vmatprep.subr.mxu0 0.0
  %60 = vmatpush1.msra.mxu0 0.0
  %61 = vmatprep.subr.mxu0 0.0
  %62 = vmatpush1.msra.mxu0 0.0
  %63 = vmatprep.subr.mxu0 0.0
  %64 = vmatpush1.msra.mxu0 0.0
  %65 = vmatprep.subr.mxu0 0.0
  %66 = vmatpush1.msra.mxu0 0.0
  %67 = vmatprep.subr.mxu0 0.0
  %68 = vmatpush1.msra.mxu0 0.0
  %69 = vmatprep.subr.mxu0 0.0
  %70 = vmatpush1.msra.mxu0 0.0
  %71 = vmatprep.subr.mxu0 0.0
  %72 = vmatpush1.msra.mxu0 0.0
  %73 = vmatprep.subr.mxu0 0.0
  %74 = vmatpush1.msra.mxu0 0.0
  %75 = vmatprep.subr.mxu0 0.0
  %76 = vmatpush1.msra.mxu0 0.0
  %77 = vmatprep.subr.mxu0 0.0
  %78 = vmatpush1.msra.mxu0 0.0
  %79 = vmatprep.subr.mxu0 0.0
  %80 = vmatpush1.msra.mxu0 0.0
  %81 = vmatprep.subr.mxu0 0.0
  %82 = vmatpush1.msra.mxu0 0.0
  %83 = vmatprep.subr.mxu0 0.0
  %84 = vmatpush1.msra.mxu0 0.0
  %85 = vmatprep.subr.mxu0 0.0
  %86 = vmatpush1.msra.mxu0 0.0
  %87 = vmatprep.subr.mxu0 0.0
  %88 = vmatpush1.msra.mxu0 0.0
  %89 = vmatprep.subr.mxu0 0.0
  %90 = vmatpush1.msra.mxu0 0.0
  %91 = vmatprep.subr.mxu0 0.0
  %92 = vmatpush1.msra.mxu0 0.0
  %93 = vmatprep.subr.mxu0 0.0
  %94 = vmatpush1.msra.mxu0 0.0
  %95 = vmatprep.subr.mxu0 0.0
  %96 = vmatpush1.msra.mxu0 0.0
  %97 = vmatprep.mubr.f32.mxu0 0.0
  %98 = vmatmul.mubr.f32.gmra.mrb[0].mxu0 %v31
  %v99 = vpop.f32.mrb[0].mxu0
  %v100 = vadd.f32 %v28, %v99
  %v101 = vpop.f32.mrb[0].mxu0
  %102 = vdwg.mxu0
  %v103 = vtanh.pop %v100
  %v104 = vlaneseq
  %v105 = vshrl.u32 %v104, 7
  %v106 = vsub.s32 0, %v105
  %v107 = vrot.slane %v21, %v106
  %vm108 = vcmask 130048
  %v110 = vsel %vm108, %v103, 0
  %112 = vmatprep.subr.mxu0 0.0
  %113 = vmatpush1.msra.mxu0 %v22
  %114 = vmatprep.subr.mxu0 0.0
  %115 = vmatpush1.msra.mxu0 %v23
  %116 = vmatprep.subr.mxu0 0.0
  %117 = vmatpush1.msra.mxu0 0.0
  %118 = vmatprep.subr.mxu0 0.0
  %119 = vmatpush1.msra.mxu0 0.0
  %120 = vmatprep.subr.mxu0 0.0
  %121 = vmatpush1.msra.mxu0 0.0
  %122 = vmatprep.subr.mxu0 0.0
  %123 = vmatpush1.msra.mxu0 0.0
  %124 = vmatprep.subr.mxu0 0.0
  %125 = vmatpush1.msra.mxu0 0.0
  %126 = vmatprep.subr.mxu0 0.0
  %127 = vmatpush1.msra.mxu0 0.0
  %128 = vmatprep.subr.mxu0 0.0
  %129 = vmatpush1.msra.mxu0 0.0
  %130 = vmatprep.subr.mxu0 0.0
  %131 = vmatpush1.msra.mxu0 0.0
  %132 = vmatprep.subr.mxu0 0.0
  %133 = vmatpush1.msra.mxu0 0.0
  %134 = vmatprep.subr.mxu0 0.0
  %135 = vmatpush1.msra.mxu0 0.0
  %136 = vmatprep.subr.mxu0 0.0
  %137 = vmatpush1.msra.mxu0 0.0
  %138 = vmatprep.subr.mxu0 0.0
  %139 = vmatpush1.msra.mxu0 0.0
  %140 = vmatprep.subr.mxu0 0.0
  %141 = vmatpush1.msra.mxu0 0.0
  %142 = vmatprep.subr.mxu0 0.0
  %143 = vmatpush1.msra.mxu0 0.0
  %144 = vmatprep.subr.mxu0 0.0
  %145 = vmatpush1.msra.mxu0 0.0
  %146 = vmatprep.subr.mxu0 0.0
  %147 = vmatpush1.msra.mxu0 0.0
  %148 = vmatprep.subr.mxu0 0.0
  %149 = vmatpush1.msra.mxu0 0.0
  %150 = vmatprep.subr.mxu0 0.0
  %151 = vmatpush1.msra.mxu0 0.0
  %152 = vmatprep.subr.mxu0 0.0
  %153 = vmatpush1.msra.mxu0 0.0
  %154 = vmatprep.subr.mxu0 0.0
  %155 = vmatpush1.msra.mxu0 0.0
  %156 = vmatprep.subr.mxu0 0.0
  %157 = vmatpush1.msra.mxu0 0.0
  %158 = vmatprep.subr.mxu0 0.0
  %159 = vmatpush1.msra.mxu0 0.0
  %160 = vmatprep.subr.mxu0 0.0
  %161 = vmatpush1.msra.mxu0 0.0
  %162 = vmatprep.subr.mxu0 0.0
  %163 = vmatpush1.msra.mxu0 0.0
  %164 = vmatprep.subr.mxu0 0.0
  %165 = vmatpush1.msra.mxu0 0.0
  %166 = vmatprep.subr.mxu0 0.0
  %167 = vmatpush1.msra.mxu0 0.0
  %168 = vmatprep.subr.mxu0 0.0
  %169 = vmatpush1.msra.mxu0 0.0
  %170 = vmatprep.subr.mxu0 0.0
  %171 = vmatpush1.msra.mxu0 0.0
  %172 = vmatprep.subr.mxu0 0.0
  %173 = vmatpush1.msra.mxu0 0.0
  %174 = vmatprep.subr.mxu0 0.0
  %175 = vmatpush1.msra.mxu0 0.0
  %176 = vmatprep.mubr.f32.mxu0 0.0
  %177 = vmatmul.mubr.f32.gmra.mrb[0].mxu0 %v110
  %v178 = vpop.f32.mrb[0].mxu0
  %v179 = vadd.f32 %v107, %v178
  %v180 = vpop.f32.mrb[0].mxu0
  %181 = vdwg.mxu0
  %v182 = vsub.f32 0.0, %v179
  %v183 = vmul.f32 %v182, 1.442695
  %v184 = vpow.pop %v183
  %v185 = vld [vmem:[%s0] sm:$0xff]
  %v186 = vlog2.pop %v185
  %v187 = vmul.f32 %v186, 0.6931472
  %189 = vrot.lane.b32.xlu0 %v182, 1
  %v190 = vpop.permute.xlu0 %189
  %v192 = vadd.f32 %v182, %v190
  %v193 = vsub.f32 %v184, 1.0
  %195 = vrot.lane.b32.xlu0 %v187, 127
  %v196 = vpop.permute.xlu0 %195
  %v198 = vmul.f32 %v193, %v196
  %200 = vrot.lane.b32.xlu0 %v198, 1
  %v201 = vpop.permute.xlu0 %200
  %v203 = vadd.f32 %v192, %v201
  %v204 = vmul.f32 %v184, %v196
  %206 = vrot.lane.b32.xlu0 %v204, 1
  %v207 = vpop.permute.xlu0 %206
  %v209 = vadd.f32 %v182, %v207
  %211 = vrot.lane.b32.xlu0 %v203, 127
  %v212 = vpop.permute.xlu0 %211
  %v214 = vmul.f32 %v185, %v212
  %vm215 = vcmask 7168
  %216 = vst.msk [vmem:[%s3] sm:$0xff] %vm215, %v214
  %v217 = vmul.f32 %v209, 1.442695
  %v218 = vpow.pop %v217
  %v219 = vsub.f32 0.0, %v218
  %221 = vrot.lane.b32.xlu0 %v219, 127
  %v222 = vpop.permute.xlu0 %221
  %224 = vst.msk [vmem:[%s4] sm:$0xff] %vm215, %v222
  // Predicated region
  $region14: #{tpu_custom_call.1} parent=0 // pred_check
    _
  $region15: #{tpu_custom_call.1} parent=0 // pred_check_branch
    %226 = sbr.rel (0) target = $region17
  $region16: #{tpu_custom_call.1} parent=0 // pred_region
    _
  $region17: #{tpu_custom_call.1} parent=0 // pred_fallthru
    _
  // Predicated region
  $region18: #{tpu_custom_call.1} parent=0 // pred_check
    _
  $region19: #{tpu_custom_call.1} parent=0 // pred_check_branch
    %228 = sbr.rel (0) target = $region21
  $region20: #{tpu_custom_call.1} parent=0 // pred_region
    _
  $region21: #{tpu_custom_call.1} parent=0 // pred_fallthru
    _
  // Predicated region
  $region22: #{tpu_custom_call.1} parent=0 // pred_check
    _
  $region23: #{tpu_custom_call.1} parent=0 // pred_check_branch
    %230 = sbr.rel (0) target = $region25
  $region24: #{tpu_custom_call.1} parent=0 // pred_region
    _
  $region25: #{tpu_custom_call.1} parent=0 // pred_fallthru
    _
  // Predicated region
  $region26: #{tpu_custom_call.1} parent=0 // pred_check
    _
  $region27: #{tpu_custom_call.1} parent=0 // pred_check_branch
    %232 = sbr.rel (0) target = $region29
  $region28: #{tpu_custom_call.1} parent=0 // pred_region
    _
  $region29: #{tpu_custom_call.1} parent=0 // pred_fallthru
    _

</llo_original>
